<compile_context>
chip_gen: v6e
topology: v6e:2x2x1
jax: 0.10.0
libtpu: 0.0.40
codegen_flags: <defaults>
</compile_context>

<pallas_src>
import functools

import jax
import jax.numpy as jnp
from jax.experimental import pallas as pl
from jax.experimental.pallas import tpu as pltpu

_LANES = 128
_SUBLANES = 8
_MIN_PAD = _SUBLANES * _LANES          # pad nnz to a multiple of 1024 elements
_MAX_BLOCK_ROWS = 1024                 # 1024 x 128 f32 = 512 KiB per buffer


def _dropout_kernel(seed_ref, val_ref, out_ref, *, threshold, scale):
    """Elementwise dropout on one (block_rows, 128) tile of the value slab."""
    rows, lanes = val_ref.shape
    i = pl.program_id(0)

    # Unique global element index for every lane in this tile.
    row_ids = jax.lax.broadcasted_iota(jnp.int32, (rows, lanes), 0)
    lane_ids = jax.lax.broadcasted_iota(jnp.int32, (rows, lanes), 1)
    gidx = (i * rows + row_ids) * lanes + lane_ids

    # Counter-based PRNG: mix seed into the index, then murmur3 finalizer.
    x = gidx.astype(jnp.uint32)
    seed_u = seed_ref[0].astype(jnp.uint32)
    x = x + seed_u * jnp.uint32(0x9E3779B1)
    x ^= x >> 16
    x *= jnp.uint32(0x85EBCA6B)
    x ^= x >> 13
    x *= jnp.uint32(0xC2B2AE35)
    x ^= x >> 16

    # Integer-threshold keep mask: P(keep) = 1 - p.
    keep = x >= jnp.uint32(threshold)

    v = val_ref[...].astype(jnp.float32)
    out_ref[...] = jnp.where(
        keep, v * jnp.float32(scale), jnp.float32(0.0)
    ).astype(out_ref.dtype)


def sparse_dropout(indices, values, shape, *, p, training, seed=0,
                   max_block_rows=_MAX_BLOCK_ROWS):
    """Dropout on the values of a coalesced sparse tensor.

    Returns (indices, new_values, shape) — same structure, dropped values.
    """
    if (not training) or p <= 0.0:
        return indices, values, shape
    if p >= 1.0:
        # PyTorch drops everything at p == 1; avoid 0 * inf NaNs.
        return indices, jnp.zeros_like(values), shape

    assert max_block_rows % _SUBLANES == 0

    nnz = values.shape[0]
    padded = ((nnz + _MIN_PAD - 1) // _MIN_PAD) * _MIN_PAD
    # Cheap pad (<= 1023 elements) instead of a full-size zeros + scatter.
    vals2d = jnp.pad(values, (0, padded - nnz)).reshape(padded // _LANES, _LANES)
    rows = padded // _LANES

    block_rows = min(max_block_rows, rows)
    grid = (pl.cdiv(rows, block_rows),)

    threshold = min(int(p * 4294967296.0), 4294967295)
    scale = 1.0 / (1.0 - p)
    seed_arr = jnp.array([seed], dtype=jnp.int32)

    out2d = pl.pallas_call(
        functools.partial(_dropout_kernel, threshold=threshold, scale=scale),
        out_shape=jax.ShapeDtypeStruct(vals2d.shape, vals2d.dtype),
        grid_spec=pltpu.PrefetchScalarGridSpec(
            num_scalar_prefetch=1,
            grid=grid,
            in_specs=[pl.BlockSpec((block_rows, _LANES), lambda i, seed: (i, 0))],
            out_specs=pl.BlockSpec((block_rows, _LANES), lambda i, seed: (i, 0)),
        ),
        input_output_aliases={1: 0},  # update the padded value slab in place
        compiler_params=pltpu.CompilerParams(
            dimension_semantics=("parallel",),
        ),
    )(seed_arr, vals2d)

    new_values = out2d.reshape(-1)[:nnz]
    return indices, new_values, shape


if __name__ == "__main__":
    key = jax.random.PRNGKey(0)
    k_idx, k_val = jax.random.split(key)

    # Small coalesced sparse matrix: shape (16, 16), nnz = 40.
    dense_shape = (16, 16)
    nnz = 40
    flat = jnp.sort(
        jax.random.choice(
            k_idx, dense_shape[0] * dense_shape[1], shape=(nnz,), replace=False
        )
    )
    rows_i = flat // dense_shape[1]
    cols_i = flat % dense_shape[1]
    indices = jnp.stack([rows_i, cols_i], axis=0).astype(jnp.int32)  # (2, nnz)
    values = jax.random.normal(k_val, (nnz,), dtype=jnp.float32)     # (nnz,)

    p = 0.5
    out_indices, out_values, out_shape = sparse_dropout(
        indices, values, dense_shape, p=p, training=True, seed=1234
    )
    out_values = jax.block_until_ready(out_values)

    # Sanity: surviving entries are exactly scaled originals, dropped are zero.
    kept = out_values != 0.0
    ref_kept = values[kept] * jnp.float32(1.0 / (1.0 - p))
    ok_scale = bool(jnp.allclose(out_values[kept], ref_kept, rtol=1e-6))
    ok_shape = (out_values.shape == values.shape
                and out_indices.shape == indices.shape)
    assert ok_scale and ok_shape

    # Coverage: multi-tile grid with a ragged last block (tiny block size).
    nnz2 = 2500
    values2 = jax.random.normal(jax.random.PRNGKey(1), (nnz2,), dtype=jnp.float32)
    ar = jnp.arange(nnz2)
    indices2 = jnp.stack([ar // 64, ar % 64], axis=0).astype(jnp.int32)
    p2 = 0.3
    _, out2, _ = sparse_dropout(
        indices2, values2, (64, 64), p=p2, training=True, seed=7,
        max_block_rows=16,
    )
    out2 = jax.block_until_ready(out2)
    kept2 = out2 != 0.0
    ref2 = values2[kept2] * jnp.float32(1.0 / (1.0 - p2))
    assert bool(jnp.allclose(out2[kept2], ref2, rtol=1e-6))
    assert out2.shape == values2.shape

    # Eval mode: values pass through unchanged.
    _, eval_values, _ = sparse_dropout(
        indices, values, dense_shape, p=p, training=False
    )
    assert bool(jnp.array_equal(eval_values, values))

    # p == 1.0: everything dropped, no NaNs.
    _, all_drop, _ = sparse_dropout(
        indices, values, dense_shape, p=1.0, training=True
    )
    assert bool(jnp.all(all_drop == 0.0))

    print("KERNEL_OK")
</pallas_src>

<mosaic_0001>
module attributes {stable_mosaic.version = 11 : i64} {
  func.func @_dropout_kernel(%arg0: i32, %arg1: memref<1xi32, #tpu.memory_space<smem>>, %arg2: memref<8x128xf32, #tpu.memory_space<vmem>>, %arg3: memref<8x128xf32, #tpu.memory_space<vmem>>) attributes {dimension_semantics = [#tpu.dimension_semantics<parallel>], iteration_bounds = array<i64: 1>, scalar_prefetch = 1 : i64, scratch_operands = 0 : i64, tpu.core_type = #tpu.core_type<tc>, window_params = [{transform_indices = @transform_0, window_bounds = array<i64: 8, 128>}, {transform_indices = @transform_1, window_bounds = array<i64: 8, 128>}]} {
    %0 = tpu.iota {dimensions = array<i32: 0>} : vector<8x128xi32>
    %1 = tpu.iota {dimensions = array<i32: 1>} : vector<8x128xi32>
    %c8_i32 = arith.constant 8 : i32
    %2 = arith.muli %arg0, %c8_i32 : i32
    %3 = vector.broadcast %2 : i32 to vector<8x128xi32>
    %4 = arith.addi %3, %0 : vector<8x128xi32>
    %c128_i32 = arith.constant 128 : i32
    %5 = vector.broadcast %c128_i32 : i32 to vector<8x128xi32>
    %6 = arith.muli %4, %5 : vector<8x128xi32>
    %7 = arith.addi %6, %1 : vector<8x128xi32>
    %c0 = arith.constant 0 : index
    %8 = memref.load %arg1[%c0] : memref<1xi32, #tpu.memory_space<smem>>
    %c-1640531535_i32 = arith.constant -1640531535 : i32
    %9 = arith.muli %8, %c-1640531535_i32 : i32
    %10 = vector.broadcast %9 : i32 to vector<8x128xi32>
    %11 = arith.addi %7, %10 : vector<8x128xi32>
    %c16_i32 = arith.constant 16 : i32
    %12 = vector.broadcast %c16_i32 : i32 to vector<8x128xi32>
    %13 = arith.shrui %11, %12 : vector<8x128xi32>
    %14 = arith.xori %11, %13 : vector<8x128xi32>
    %c-2048144789_i32 = arith.constant -2048144789 : i32
    %15 = vector.broadcast %c-2048144789_i32 : i32 to vector<8x128xi32>
    %16 = arith.muli %14, %15 : vector<8x128xi32>
    %c13_i32 = arith.constant 13 : i32
    %17 = vector.broadcast %c13_i32 : i32 to vector<8x128xi32>
    %18 = arith.shrui %16, %17 : vector<8x128xi32>
    %19 = arith.xori %16, %18 : vector<8x128xi32>
    %c-1028477387_i32 = arith.constant -1028477387 : i32
    %20 = vector.broadcast %c-1028477387_i32 : i32 to vector<8x128xi32>
    %21 = arith.muli %19, %20 : vector<8x128xi32>
    %c16_i32_0 = arith.constant 16 : i32
    %22 = vector.broadcast %c16_i32_0 : i32 to vector<8x128xi32>
    %23 = arith.shrui %21, %22 : vector<8x128xi32>
    %24 = arith.xori %21, %23 : vector<8x128xi32>
    %c-2147483648_i32 = arith.constant -2147483648 : i32
    %25 = vector.broadcast %c-2147483648_i32 : i32 to vector<8x128xi32>
    %26 = arith.cmpi uge, %24, %25 : vector<8x128xi32>
    %c0_1 = arith.constant 0 : index
    %c0_2 = arith.constant 0 : index
    %27 = vector.load %arg2[%c0_1, %c0_2] : memref<8x128xf32, #tpu.memory_space<vmem>>, vector<8x128xf32>
    %cst = arith.constant 2.000000e+00 : f32
    %28 = vector.broadcast %cst : f32 to vector<8x128xf32>
    %29 = arith.mulf %27, %28 : vector<8x128xf32>
    %cst_3 = arith.constant 0.000000e+00 : f32
    %30 = vector.broadcast %cst_3 : f32 to vector<8x128xf32>
    %31 = arith.select %26, %29, %30 : vector<8x128xi1>, vector<8x128xf32>
    %c0_4 = arith.constant 0 : index
    %c0_5 = arith.constant 0 : index
    %32 = vector.load %arg3[%c0_4, %c0_5] : memref<8x128xf32, #tpu.memory_space<vmem>>, vector<8x128xf32>
    tpu.vector_store %arg3[%c0_4, %c0_5], %31 {strides = array<i32>} : memref<8x128xf32, #tpu.memory_space<vmem>>, vector<8x128xf32>,
    return
  }
  func.func @transform_0(%arg0: i32, %arg1: memref<1xi32, #tpu.memory_space<smem>>) -> (i32, i32) {
    %c0_i32 = arith.constant 0 : i32
    %c0_i32_0 = arith.constant 0 : i32
    return %arg0, %c0_i32 : i32, i32
  }
  func.func @transform_1(%arg0: i32, %arg1: memref<1xi32, #tpu.memory_space<smem>>) -> (i32, i32) {
    %c0_i32 = arith.constant 0 : i32
    %c0_i32_0 = arith.constant 0 : i32
    return %arg0, %c0_i32 : i32, i32
  }
}

</mosaic_0001>

<llo_original>
// kernel: tpu_custom_call.1
$region0: #{tpu_custom_call.1}
  #allocation0 [shape = 'u32[]', space=smem, size = 0x4, offset = 0x4, fixed_abs, tag = 'smem constant byte address 0x4 - core index']
  #allocation1 [shape = 'u32[144,128]{1,0:T(1,128)}', space=vmem, size = 0x12000, scoped, tag = 'internal scratch']
  #allocation2 [shape = 's32[1]{0}', space=sflag, size = 0x4, scoped, tag = 'scoped memory for tpu_custom_call.1']
  #allocation3 [shape = 's32[1]{0:T(128)S(6)}', space=smem, size = 0x200, scoped, tag = 'prefetched SMEM operand 0']
  %s0 = inlined_call_operand.<no memory space> [shape: s32[1], index: 0, kind: input, shape index: {}]
  %s1 = inlined_call_operand.hbm [shape: f32[8,128], index: 1, kind: input, shape index: {}, may-alias: {1,2}]
  %s2 = inlined_call_operand.hbm [shape: f32[8,128], index: 2, kind: output, shape index: {}, may-alias: {1,2}]
  %s3 = sld [smem:[#allocation0]]
  $region18: #{tpu_custom_call.1} parent=0
    _
  %s5 = ssub.s32 1, %s3
  %s6 = scalar_select 0, %s5, %s3
  %7 = sst [smem:[#allocation3]] %s0
  $region1: #{tpu_custom_call.1} parent=0
    #allocation4 [shape = 'u8[4096]{0}', space=vmem, size = 0x1000, scoped, tag = 'input window, operand 1, single buffered']
    #allocation5 [shape = 's32[1]{0}', space=sflag, size = 0x4, scoped, tag = 'scoped memory for tpu_custom_call.1']
    #allocation6 [shape = 's32[1]{0}', space=sflag, size = 0x4, scoped, tag = 'scoped memory for tpu_custom_call.1']
    #allocation7 [shape = 'u8[4096]{0}', space=vmem, size = 0x1000, scoped, tag = 'output window, operand 0, single buffered']
    %8 = vsyncpa [#allocation5], 0
    %9 = vsyncpa [#allocation6], 0
    // Predicated region
    $region2: #{tpu_custom_call.1} parent=1 // pred_check
      _
    $region3: #{tpu_custom_call.1} parent=1 // pred_check_branch
      %11 = sbr.rel (0) target = $region5
    $region4: #{tpu_custom_call.1} parent=1 // pred_region
      %s13 = ssub.s32 128, 128
      %14 = vsyncadd [#allocation5], %s13
      %s16 = sshll.u32 [#allocation4], 4
      %s17 = int_to_ptr.vmem [resolvable:$true] %s16
      %19 = dma.hbm_to_vmem [thread:$0]  %s1, 128, %s17, [#allocation5]
    $region5: #{tpu_custom_call.1} parent=1 // pred_fallthru
      _
    // Predicated region
    $region6: #{tpu_custom_call.1} parent=1 // pred_check
      _
    $region7: #{tpu_custom_call.1} parent=1 // pred_check_branch
      %21 = sbr.rel (0) target = $region9
    $region8: #{tpu_custom_call.1} parent=1 // pred_region
      %22 = dma.done [#allocation5], 128
    $region9: #{tpu_custom_call.1} parent=1 // pred_fallthru
      _
    %v23 = vlaneseq
    %v24 = vshrl.u32 %v23, 7
    %v25 = vlaneseq
    %v26 = vand.u32 %v25, 127
    %s27 = smul.u32 0, 8
    %v28 = vstv %s27
    %v29 = vadd.s32 %v28, %v24
    %v30 = vmul.u32 %v29, 128
    %v31 = vadd.s32 %v30, %v26
    %s32 = sld [smem:[#allocation3]]
    %s33 = smul.u32 %s32, 2654435761
    %v34 = vstv %s33
    %v35 = vadd.s32 %v31, %v34
    %v36 = vshrl.u32 %v35, 16
    %v37 = vxor.u32 %v35, %v36
    %v38 = vmul.u32 %v37, 2246822507
    %v39 = vshrl.u32 %v38, 13
    %v40 = vxor.u32 %v38, %v39
    %v41 = vmul.u32 %v40, 3266489909
    %v42 = vshrl.u32 %v41, 16
    %v43 = vxor.u32 %v41, %v42
    %vm44 = vcmp.ge.u32.totalorder %v43, 2147483648
    %v45 = vld [vmem:[#allocation4] sm:$0xff]
    %v46 = vmul.f32 %v45, 2.0
    %v47 = vsel %vm44, %v46, 0.0
    %48 = vst [vmem:[#allocation7] sm:$0xff] %v47
    // Predicated region
    $region10: #{tpu_custom_call.1} parent=1 // pred_check
      _
    $region11: #{tpu_custom_call.1} parent=1 // pred_check_branch
      %50 = sbr.rel (0) target = $region13
    $region12: #{tpu_custom_call.1} parent=1 // pred_region
      %s52 = ssub.s32 128, 128
      %53 = vsyncadd [#allocation6], %s52
      %s55 = sshll.u32 [#allocation7], 4
      %s56 = int_to_ptr.vmem [resolvable:$true] %s55
      %58 = dma.vmem_to_hbm [thread:$0]  %s56, 128, %s2, [#allocation6]
    $region13: #{tpu_custom_call.1} parent=1 // pred_fallthru
      _
    // Predicated region
    $region14: #{tpu_custom_call.1} parent=1 // pred_check
      _
    $region15: #{tpu_custom_call.1} parent=1 // pred_check_branch
      %60 = sbr.rel (0) target = $region17
    $region16: #{tpu_custom_call.1} parent=1 // pred_region
      %61 = dma.done [#allocation6], 128
    $region17: #{tpu_custom_call.1} parent=1 // pred_fallthru
      _
    %62 = vsyncpa [#allocation5], 1
    %63 = vsyncpa [#allocation6], 1

</llo_original>
